<compile_context>
chip_gen: v7x
topology: tpu7x:2x2x1
jax: 0.10.0
libtpu: 0.0.40
codegen_flags: <defaults>
</compile_context>

<pallas_src>
import math

import jax
import jax.numpy as jnp
from jax.experimental import pallas as pl
from jax.experimental.pallas import tpu as pltpu


def _round_up(x, m):
    return ((x + m - 1) // m) * m


def _pad_cast(a, shape, dtype):
    """Zero-pad `a` up to `shape` and cast to `dtype`; skip the copy when it is a no-op."""
    if tuple(a.shape) == tuple(shape) and a.dtype == jnp.dtype(dtype):
        return a
    return (
        jnp.zeros(shape, dtype)
        .at[tuple(slice(0, s) for s in a.shape)]
        .set(a.astype(dtype))
    )


def _gcn_fused_kernel(adj_ref, x_ref, w_ref, b_ref, o_ref):
    """One (row-tile i, inner-node-tile k) step of  out = adj @ (X @ W) + bias.

    adj_ref : (tm, tk)         compute dtype (bf16 by default)
    x_ref   : (tk, in_f)       compute dtype
    w_ref   : (in_f, out_f_p)  compute dtype; block index constant -> VMEM-resident
    b_ref   : (1,  out_f_p)    f32;           block index constant -> VMEM-resident
    o_ref   : (tm, out_f_p)    f32; resident across k and used directly as the accumulator
    """
    k = pl.program_id(1)

    # Support tile recomputed on the fly (MXU work is free; phase is HBM-bound on adj).
    support = jnp.dot(
        x_ref[...], w_ref[...], preferred_element_type=jnp.float32
    ).astype(adj_ref.dtype)

    partial = jnp.dot(adj_ref[...], support, preferred_element_type=jnp.float32)

    @pl.when(k == 0)
    def _():
        o_ref[...] = partial              # first k step: assign (no zero-then-add pass)

    @pl.when(k != 0)
    def _():
        o_ref[...] += partial

    @pl.when(k == pl.num_programs(1) - 1)
    def _():
        o_ref[...] += b_ref[...]          # bias added exactly once, on the final k step


def gcn_layer(
    x,
    adj,
    weight,
    bias,
    *,
    tm=512,
    tk=1024,
    compute_dtype=jnp.bfloat16,
    vmem_limit_bytes=48 << 20,
):
    """Pallas forward of GCN_layer: (adj @ (x @ weight)) + bias.

    tm : node-row tile of adj / output (multiple of 8).
    tk : inner-node (reduction) tile of adj (multiple of 128).
    compute_dtype : dtype of adj / X / W for the matmuls (accumulation is always f32).
                    bf16 (default) halves the dominant adj HBM stream on all generations.
    vmem_limit_bytes : scoped VMEM limit. 48 MiB fits every generation; on v5e/v6e
        (128 MiB physical) it can be raised to 64-96 MiB together with larger tiles,
        on v7x (64 MiB physical) keep it <= ~48 MiB and budget tiles as
        2*(tm*tk) adj + 2*(tk*in_f) X + tm*out_f_p acc/out (bytes in compute dtype / f32).
        On v7x also pick tm so n_pad // tm >= 2 (two TensorCores share the parallel axis).
    """
    assert tm % 8 == 0 and tk % 128 == 0, "tm must be a multiple of 8, tk of 128"
    n, in_f = x.shape
    out_f = weight.shape[1]
    out_f_p = _round_up(out_f, 128)           # lane-dense output stores

    # Clamp tiles for small graphs (keeps padding minimal; blocks stay (8,128)-legal).
    tm = min(tm, _round_up(n, 8))
    tk = min(tk, _round_up(n, 128))

    # Rows padded to tm, inner/column axis padded to tk -- independently.
    n_rows_pad = _round_up(n, tm)
    n_cols_pad = _round_up(n, tk)

    # Pad + cast fused in one pass; no copy at all when shapes/dtypes already match.
    adj_p = _pad_cast(adj, (n_rows_pad, n_cols_pad), compute_dtype)
    x_p = _pad_cast(x, (n_cols_pad, in_f), compute_dtype)          # in_f NOT padded
    w_p = _pad_cast(weight, (in_f, out_f_p), compute_dtype)
    b_p = _pad_cast(bias.reshape(1, -1), (1, out_f_p), jnp.float32)

    r_tiles = n_rows_pad // tm
    k_tiles = n_cols_pad // tk
    c_esz = jnp.dtype(compute_dtype).itemsize

    # TODO(synk): accuracy-gated v7x option -- store adj in fp8 (e4m3) for the aggregation
    # matmul (values of a normalized adjacency lie in [0,1]); keep f32 accumulation.
    out_p = pl.pallas_call(
        _gcn_fused_kernel,
        out_shape=jax.ShapeDtypeStruct((n_rows_pad, out_f_p), jnp.float32),
        grid=(r_tiles, k_tiles),
        in_specs=[
            pl.BlockSpec((tm, tk), lambda i, k: (i, k)),            # adj tile (dominant stream)
            pl.BlockSpec((tk, in_f), lambda i, k: (k, 0)),          # X tile (tiny)
            pl.BlockSpec((in_f, out_f_p), lambda i, k: (0, 0)),     # W, VMEM-resident
            pl.BlockSpec((1, out_f_p), lambda i, k: (0, 0)),        # bias, VMEM-resident
        ],
        out_specs=pl.BlockSpec((tm, out_f_p), lambda i, k: (i, 0)),  # resident across k
        compiler_params=pltpu.CompilerParams(
            dimension_semantics=("parallel", "arbitrary"),
            vmem_limit_bytes=vmem_limit_bytes,
        ),
        cost_estimate=pl.CostEstimate(
            flops=2 * n_rows_pad * n_cols_pad * out_f_p
            + 2 * r_tiles * n_cols_pad * in_f * out_f_p,
            transcendentals=0,
            bytes_accessed=c_esz * n_rows_pad * n_cols_pad          # adj, read once
            + c_esz * r_tiles * n_cols_pad * in_f                   # X, re-read per row tile
            + c_esz * in_f * out_f_p                                # W
            + 4 * out_f_p                                           # bias
            + 4 * n_rows_pad * out_f_p,                             # output
        ),
    )(adj_p, x_p, w_p, b_p)

    return out_p[:n, :out_f].astype(x.dtype)


if __name__ == "__main__":
    # Small deterministic problem: 8 nodes, in_features=16, out_features=32.
    num_nodes, in_features, out_features = 8, 16, 32

    key = jax.random.PRNGKey(0)
    kx, ka, kw, kb = jax.random.split(key, 4)

    x = jax.random.normal(kx, (num_nodes, in_features), dtype=jnp.float32)

    # Symmetric normalized adjacency (dense stand-in for torch.spmm's sparse adj).
    adj_raw = jax.random.uniform(ka, (num_nodes, num_nodes), dtype=jnp.float32)
    adj = (adj_raw + adj_raw.T) * 0.5 + jnp.eye(num_nodes, dtype=jnp.float32)
    adj = adj / jnp.sum(adj, axis=1, keepdims=True)

    # Deterministic parameter init (nn.Linear-style uniform bound), no checkpoint load.
    bound = 1.0 / math.sqrt(in_features)
    weight = jax.random.uniform(
        kw, (in_features, out_features), minval=-bound, maxval=bound, dtype=jnp.float32
    )
    bias = jax.random.uniform(
        kb, (out_features,), minval=-bound, maxval=bound, dtype=jnp.float32
    )

    out = gcn_layer(x, adj, weight, bias)
    jax.block_until_ready(out)

    # Reference emulating the kernel's bf16-input / f32-accumulate arithmetic.
    hp = jax.lax.Precision.HIGHEST
    xc = x.astype(jnp.bfloat16).astype(jnp.float32)
    wc = weight.astype(jnp.bfloat16).astype(jnp.float32)
    ac = adj.astype(jnp.bfloat16).astype(jnp.float32)
    support = jnp.dot(xc, wc, precision=hp).astype(jnp.bfloat16).astype(jnp.float32)
    ref = jnp.dot(ac, support, precision=hp) + bias[None, :]

    assert out.shape == (num_nodes, out_features)
    assert jnp.allclose(out, ref, atol=1e-3, rtol=1e-3), (
        float(jnp.max(jnp.abs(out - ref)))
    )

    # Also sanity-check against the plain f32 math with a bf16-appropriate tolerance.
    ref_f32 = adj @ (x @ weight) + bias[None, :]
    assert jnp.allclose(out, ref_f32, atol=3e-2, rtol=3e-2)

    print("KERNEL_OK")
</pallas_src>

<mosaic_0001>
module attributes {stable_mosaic.version = 11 : i64} {
  func.func @_gcn_fused_kernel(%arg0: i32, %arg1: i32, %arg2: memref<8x128xbf16, #tpu.memory_space<vmem>>, %arg3: memref<128x16xbf16, #tpu.memory_space<vmem>>, %arg4: memref<16x128xbf16, #tpu.memory_space<vmem>>, %arg5: memref<1x128xf32, #tpu.memory_space<vmem>>, %arg6: memref<8x128xf32, #tpu.memory_space<vmem>>) attributes {dimension_semantics = [#tpu.dimension_semantics<parallel>, #tpu.dimension_semantics<arbitrary>], iteration_bounds = array<i64: 1, 1>, scalar_prefetch = 0 : i64, scratch_operands = 0 : i64, tpu.core_type = #tpu.core_type<tc>, window_params = [{transform_indices = @transform_0, window_bounds = array<i64: 8, 128>}, {transform_indices = @transform_1, window_bounds = array<i64: 128, 16>}, {pipeline_mode = #tpu.pipeline_mode<synchronous>, transform_indices = @transform_2, window_bounds = array<i64: 16, 128>}, {pipeline_mode = #tpu.pipeline_mode<synchronous>, transform_indices = @transform_3, window_bounds = array<i64: 1, 128>}, {transform_indices = @transform_4, window_bounds = array<i64: 8, 128>}]} {
    %c0 = arith.constant 0 : index
    %c0_0 = arith.constant 0 : index
    %0 = vector.load %arg3[%c0, %c0_0] : memref<128x16xbf16, #tpu.memory_space<vmem>>, vector<128x16xbf16>
    %c0_1 = arith.constant 0 : index
    %c0_2 = arith.constant 0 : index
    %1 = vector.load %arg4[%c0_1, %c0_2] : memref<16x128xbf16, #tpu.memory_space<vmem>>, vector<16x128xbf16>
    %cst = arith.constant dense<0.000000e+00> : vector<128x128xf32>
    %2 = tpu.matmul %0, %1, %cst {dimension_numbers = #tpu.dot_dimension_numbers<[1], [0], [0], [1], [0, 0, 1, 1], [], []>} : vector<128x16xbf16>, vector<16x128xbf16>, vector<128x128xf32> -> vector<128x128xf32>
    %3 = arith.truncf %2 : vector<128x128xf32> to vector<128x128xbf16>
    %c0_3 = arith.constant 0 : index
    %c0_4 = arith.constant 0 : index
    %4 = vector.load %arg2[%c0_3, %c0_4] : memref<8x128xbf16, #tpu.memory_space<vmem>>, vector<8x128xbf16>
    %cst_5 = arith.constant dense<0.000000e+00> : vector<8x128xf32>
    %5 = tpu.matmul %4, %3, %cst_5 {dimension_numbers = #tpu.dot_dimension_numbers<[1], [0], [0], [1], [0, 0, 1, 1], [], []>} : vector<8x128xbf16>, vector<128x128xbf16>, vector<8x128xf32> -> vector<8x128xf32>
    %c0_i32 = arith.constant 0 : i32
    %6 = arith.cmpi eq, %arg1, %c0_i32 : i32
    %7 = arith.extui %6 : i1 to i32
    %c0_i32_6 = arith.constant 0 : i32
    %8 = arith.cmpi ne, %7, %c0_i32_6 : i32
    scf.if %8 {
      %c0_11 = arith.constant 0 : index
      %c0_12 = arith.constant 0 : index
      %15 = vector.load %arg6[%c0_11, %c0_12] : memref<8x128xf32, #tpu.memory_space<vmem>>, vector<8x128xf32>
      tpu.vector_store %arg6[%c0_11, %c0_12], %5 {strides = array<i32>} : memref<8x128xf32, #tpu.memory_space<vmem>>, vector<8x128xf32>,
    } else {
    }
    %c0_i32_7 = arith.constant 0 : i32
    %9 = arith.cmpi ne, %arg1, %c0_i32_7 : i32
    %10 = arith.extui %9 : i1 to i32
    %c0_i32_8 = arith.constant 0 : i32
    %11 = arith.cmpi ne, %10, %c0_i32_8 : i32
    scf.if %11 {
      %c0_11 = arith.constant 0 : index
      %c0_12 = arith.constant 0 : index
      %15 = vector.load %arg6[%c0_11, %c0_12] : memref<8x128xf32, #tpu.memory_space<vmem>>, vector<8x128xf32>
      %16 = arith.addf %15, %5 : vector<8x128xf32>
      %c0_13 = arith.constant 0 : index
      %c0_14 = arith.constant 0 : index
      %17 = vector.load %arg6[%c0_13, %c0_14] : memref<8x128xf32, #tpu.memory_space<vmem>>, vector<8x128xf32>
      tpu.vector_store %arg6[%c0_13, %c0_14], %16 {strides = array<i32>} : memref<8x128xf32, #tpu.memory_space<vmem>>, vector<8x128xf32>,
    } else {
    }
    %c0_i32_9 = arith.constant 0 : i32
    %12 = arith.cmpi eq, %arg1, %c0_i32_9 : i32
    %13 = arith.extui %12 : i1 to i32
    %c0_i32_10 = arith.constant 0 : i32
    %14 = arith.cmpi ne, %13, %c0_i32_10 : i32
    scf.if %14 {
      %c0_11 = arith.constant 0 : index
      %c0_12 = arith.constant 0 : index
      %15 = vector.load %arg6[%c0_11, %c0_12] : memref<8x128xf32, #tpu.memory_space<vmem>>, vector<8x128xf32>
      %c0_13 = arith.constant 0 : index
      %c0_14 = arith.constant 0 : index
      %16 = vector.load %arg5[%c0_13, %c0_14] : memref<1x128xf32, #tpu.memory_space<vmem>>, vector<1x128xf32>
      %17 = vector.broadcast %16 : vector<1x128xf32> to vector<8x128xf32>
      %18 = arith.addf %15, %17 : vector<8x128xf32>
      %c0_15 = arith.constant 0 : index
      %c0_16 = arith.constant 0 : index
      %19 = vector.load %arg6[%c0_15, %c0_16] : memref<8x128xf32, #tpu.memory_space<vmem>>, vector<8x128xf32>
      tpu.vector_store %arg6[%c0_15, %c0_16], %18 {strides = array<i32>} : memref<8x128xf32, #tpu.memory_space<vmem>>, vector<8x128xf32>,
    } else {
    }
    return
  }
  func.func @transform_0(%arg0: i32, %arg1: i32) -> (i32, i32) {
    %c0_i32 = arith.constant 0 : i32
    return %arg0, %arg1 : i32, i32
  }
  func.func @transform_1(%arg0: i32, %arg1: i32) -> (i32, i32) {
    %c0_i32 = arith.constant 0 : i32
    %c0_i32_0 = arith.constant 0 : i32
    return %arg1, %c0_i32 : i32, i32
  }
  func.func @transform_2(%arg0: i32, %arg1: i32) -> (i32, i32) {
    %c0_i32 = arith.constant 0 : i32
    %c0_i32_0 = arith.constant 0 : i32
    %c0_i32_1 = arith.constant 0 : i32
    return %c0_i32, %c0_i32_0 : i32, i32
  }
  func.func @transform_3(%arg0: i32, %arg1: i32) -> (i32, i32) {
    %c0_i32 = arith.constant 0 : i32
    %c0_i32_0 = arith.constant 0 : i32
    %c0_i32_1 = arith.constant 0 : i32
    return %c0_i32, %c0_i32_0 : i32, i32
  }
  func.func @transform_4(%arg0: i32, %arg1: i32) -> (i32, i32) {
    %c0_i32 = arith.constant 0 : i32
    %c0_i32_0 = arith.constant 0 : i32
    return %arg0, %c0_i32 : i32, i32
  }
}

</mosaic_0001>

<llo_original>
// kernel: tpu_custom_call.1
$region0: #{tpu_custom_call.1}
  #allocation0 [shape = 'u32[]', space=smem, size = 0x4, offset = 0x4, fixed_abs, tag = 'smem constant byte address 0x4 - core index']
  #allocation1 [shape = 'u32[144,128]{1,0:T(1,128)}', space=vmem, size = 0x12000, scoped, tag = 'internal scratch']
  %s0 = inlined_call_operand.vmem [shape: bf16[8,128], index: 0, kind: input, shape index: {}]
  %s1 = inlined_call_operand.vmem [shape: bf16[128,16], index: 1, kind: input, shape index: {}]
  %s2 = inlined_call_operand.vmem [shape: bf16[16,128], index: 2, kind: input, shape index: {}]
  %s3 = inlined_call_operand.vmem [shape: f32[1,128], index: 3, kind: input, shape index: {}]
  %s4 = inlined_call_operand.hbm [shape: f32[8,128], index: 4, kind: output, shape index: {}]
  %s5 = sld [smem:[#allocation0]]
  $region38: #{tpu_custom_call.1} parent=0
    _
  %s7 = ssub.s32 1, %s5
  %s8 = scalar_select 0, %s7, %s5
  $region1: #{tpu_custom_call.1} parent=0
    #allocation2 [shape = 'u8[4096]{0}', space=vmem, size = 0x1000, scoped, tag = 'output window, operand 0, single buffered']
    #allocation3 [shape = 's32[1]{0}', space=sflag, size = 0x4, scoped, tag = 'scoped memory for tpu_custom_call.1']
    %9 = vsyncpa [#allocation3], 0
    // Predicated region
    $region2: #{tpu_custom_call.1} parent=1 // pred_check
      _
    $region3: #{tpu_custom_call.1} parent=1 // pred_check_branch
      %11 = sbr.rel (0) target = $region5
    $region4: #{tpu_custom_call.1} parent=1 // pred_region
      _
    $region5: #{tpu_custom_call.1} parent=1 // pred_fallthru
      _
    // Predicated region
    $region6: #{tpu_custom_call.1} parent=1 // pred_check
      _
    $region7: #{tpu_custom_call.1} parent=1 // pred_check_branch
      %13 = sbr.rel (0) target = $region9
    $region8: #{tpu_custom_call.1} parent=1 // pred_region
      _
    $region9: #{tpu_custom_call.1} parent=1 // pred_fallthru
      _
    // Predicated region
    $region10: #{tpu_custom_call.1} parent=1 // pred_check
      _
    $region11: #{tpu_custom_call.1} parent=1 // pred_check_branch
      %15 = sbr.rel (0) target = $region13
    $region12: #{tpu_custom_call.1} parent=1 // pred_region
      _
    $region13: #{tpu_custom_call.1} parent=1 // pred_fallthru
      _
    // Predicated region
    $region14: #{tpu_custom_call.1} parent=1 // pred_check
      _
    $region15: #{tpu_custom_call.1} parent=1 // pred_check_branch
      %17 = sbr.rel (0) target = $region17
    $region16: #{tpu_custom_call.1} parent=1 // pred_region
      _
    $region17: #{tpu_custom_call.1} parent=1 // pred_fallthru
      _
    %v19 = vld [vmem:[%s1] sm:$0xf]
    %v20 = vld [vmem:[%s1 + $0x4] sm:$0xf]
    %v21 = vld [vmem:[%s1 + $0x8] sm:$0xf]
    %v22 = vld [vmem:[%s1 + $0xc] sm:$0xf]
    %v23 = vld [vmem:[%s1 + $0x10] sm:$0xf]
    %v24 = vld [vmem:[%s1 + $0x14] sm:$0xf]
    %v25 = vld [vmem:[%s1 + $0x18] sm:$0xf]
    %v26 = vld [vmem:[%s1 + $0x1c] sm:$0xf]
    %v27 = vld [vmem:[%s1 + $0x20] sm:$0xf]
    %v28 = vld [vmem:[%s1 + $0x24] sm:$0xf]
    %v29 = vld [vmem:[%s1 + $0x28] sm:$0xf]
    %v30 = vld [vmem:[%s1 + $0x2c] sm:$0xf]
    %v31 = vld [vmem:[%s1 + $0x30] sm:$0xf]
    %v32 = vld [vmem:[%s1 + $0x34] sm:$0xf]
    %v33 = vld [vmem:[%s1 + $0x38] sm:$0xf]
    %v34 = vld [vmem:[%s1 + $0x3c] sm:$0xf]
    %v35 = vld [vmem:[%s2] sm:$0xf]
    %v36 = vld [vmem:[%s2 + $0x4] sm:$0xf]
    %v53 = vunpack.c.l.b16 %v19
    %v54 = vunpack.c.l.b16 %v20
    %v55 = vunpack.c.l.b16 %v21
    %v56 = vunpack.c.l.b16 %v22
    %v57 = vunpack.c.l.b16 %v23
    %v58 = vunpack.c.l.b16 %v24
    %v59 = vunpack.c.l.b16 %v25
    %v60 = vunpack.c.l.b16 %v26
    %v61 = vunpack.c.l.b16 %v27
    %v62 = vunpack.c.l.b16 %v28
    %v63 = vunpack.c.l.b16 %v29
    %v64 = vunpack.c.l.b16 %v30
    %v65 = vunpack.c.l.b16 %v31
    %v66 = vunpack.c.l.b16 %v32
    %v67 = vunpack.c.l.b16 %v33
    %v68 = vunpack.c.l.b16 %v34
    %v69 = vpack.c.b16 %v54, %v53
    %v70 = vpack.c.b16 %v56, %v55
    %v71 = vpack.c.b16 %v58, %v57
    %v72 = vpack.c.b16 %v60, %v59
    %v73 = vpack.c.b16 %v62, %v61
    %v74 = vpack.c.b16 %v64, %v63
    %v75 = vpack.c.b16 %v66, %v65
    %v76 = vpack.c.b16 %v68, %v67
    %v79 = vunpack.c.l.b16 %v35
    %v80 = vunpack.c.l.b16 %v36
    %v81 = vpack.c.b16 %v80, %v79
    %vm83 = vcmask 130048
    %v85 = vsel %vm83, %v69, 0
    %v88 = vsel %vm83, %v70, 0
    %v91 = vsel %vm83, %v71, 0
    %v94 = vsel %vm83, %v72, 0
    %v97 = vsel %vm83, %v73, 0
    %v100 = vsel %vm83, %v74, 0
    %v103 = vsel %vm83, %v75, 0
    %v106 = vsel %vm83, %v76, 0
    %108 = vmatprep.subr.bf16.mxu0 0
    %109 = vmatpush1.bf16.msra.mxu0 %v81
    %110 = vmatprep.subr.bf16.mxu0 0
    %111 = vmatpush1.bf16.msra.mxu0 0
    %112 = vmatprep.subr.bf16.mxu0 0
    %113 = vmatpush1.bf16.msra.mxu0 0
    %114 = vmatprep.subr.bf16.mxu0 0
    %115 = vmatpush1.bf16.msra.mxu0 0
    %116 = vmatprep.subr.bf16.mxu0 0
    %117 = vmatpush1.bf16.msra.mxu0 0
    %118 = vmatprep.subr.bf16.mxu0 0
    %119 = vmatpush1.bf16.msra.mxu0 0
    %120 = vmatprep.subr.bf16.mxu0 0
    %121 = vmatpush1.bf16.msra.mxu0 0
    %122 = vmatprep.subr.bf16.mxu0 0
    %123 = vmatpush1.bf16.msra.mxu0 0
    %124 = vmatprep.subr.bf16.mxu0 0
    %125 = vmatpush1.bf16.msra.mxu0 0
    %126 = vmatprep.subr.bf16.mxu0 0
    %127 = vmatpush1.bf16.msra.mxu0 0
    %128 = vmatprep.subr.bf16.mxu0 0
    %129 = vmatpush1.bf16.msra.mxu0 0
    %130 = vmatprep.subr.bf16.mxu0 0
    %131 = vmatpush1.bf16.msra.mxu0 0
    %132 = vmatprep.subr.bf16.mxu0 0
    %133 = vmatpush1.bf16.msra.mxu0 0
    %134 = vmatprep.subr.bf16.mxu0 0
    %135 = vmatpush1.bf16.msra.mxu0 0
    %136 = vmatprep.subr.bf16.mxu0 0
    %137 = vmatpush1.bf16.msra.mxu0 0
    %138 = vmatprep.subr.bf16.mxu0 0
    %139 = vmatpush1.bf16.msra.mxu0 0
    %140 = vmatprep.mubr.bf16.mxu0 0
    %141 = vmatmul.mubr.bf16.gmra.mrb[0].mxu0 %v85
    %v142 = vpop.f32.mrb[0].mxu0
    %v143 = vadd.f32 0.0, %v142
    %v144 = vpop.f32.mrb[0].mxu0
    %v145 = vpop.f32.mrb[0].mxu0
    %v146 = vadd.f32 0.0, %v145
    %v147 = vpop.f32.mrb[0].mxu0
    %148 = vmatprep.mubr.bf16.mxu0 0
    %149 = vmatmul.mubr.bf16.gmra.mrb[0].mxu0 %v88
    %v150 = vpop.f32.mrb[0].mxu0
    %v151 = vadd.f32 0.0, %v150
    %v152 = vpop.f32.mrb[0].mxu0
    %v153 = vpop.f32.mrb[0].mxu0
    %v154 = vadd.f32 0.0, %v153
    %v155 = vpop.f32.mrb[0].mxu0
    %156 = vmatprep.mubr.bf16.mxu0 0
    %157 = vmatmul.mubr.bf16.gmra.mrb[0].mxu0 %v91
    %v158 = vpop.f32.mrb[0].mxu0
    %v159 = vadd.f32 0.0, %v158
    %v160 = vpop.f32.mrb[0].mxu0
    %v161 = vpop.f32.mrb[0].mxu0
    %v162 = vadd.f32 0.0, %v161
    %v163 = vpop.f32.mrb[0].mxu0
    %164 = vmatprep.mubr.bf16.mxu0 0
    %165 = vmatmul.mubr.bf16.gmra.mrb[0].mxu0 %v94
    %v166 = vpop.f32.mrb[0].mxu0
    %v167 = vadd.f32 0.0, %v166
    %v168 = vpop.f32.mrb[0].mxu0
    %v169 = vpop.f32.mrb[0].mxu0
    %v170 = vadd.f32 0.0, %v169
    %v171 = vpop.f32.mrb[0].mxu0
    %172 = vmatprep.mubr.bf16.mxu0 0
    %173 = vmatmul.mubr.bf16.gmra.mrb[0].mxu0 %v97
    %v174 = vpop.f32.mrb[0].mxu0
    %v175 = vadd.f32 0.0, %v174
    %v176 = vpop.f32.mrb[0].mxu0
    %v177 = vpop.f32.mrb[0].mxu0
    %v178 = vadd.f32 0.0, %v177
    %v179 = vpop.f32.mrb[0].mxu0
    %180 = vmatprep.mubr.bf16.mxu0 0
    %181 = vmatmul.mubr.bf16.gmra.mrb[0].mxu0 %v100
    %v182 = vpop.f32.mrb[0].mxu0
    %v183 = vadd.f32 0.0, %v182
    %v184 = vpop.f32.mrb[0].mxu0
    %v185 = vpop.f32.mrb[0].mxu0
    %v186 = vadd.f32 0.0, %v185
    %v187 = vpop.f32.mrb[0].mxu0
    %188 = vmatprep.mubr.bf16.mxu0 0
    %189 = vmatmul.mubr.bf16.gmra.mrb[0].mxu0 %v103
    %v190 = vpop.f32.mrb[0].mxu0
    %v191 = vadd.f32 0.0, %v190
    %v192 = vpop.f32.mrb[0].mxu0
    %v193 = vpop.f32.mrb[0].mxu0
    %v194 = vadd.f32 0.0, %v193
    %v195 = vpop.f32.mrb[0].mxu0
    %196 = vmatprep.mubr.bf16.mxu0 0
    %197 = vmatmul.mubr.bf16.gmra.mrb[0].mxu0 %v106
    %v198 = vpop.f32.mrb[0].mxu0
    %v199 = vadd.f32 0.0, %v198
    %v200 = vpop.f32.mrb[0].mxu0
    %v201 = vpop.f32.mrb[0].mxu0
    %v202 = vadd.f32 0.0, %v201
    %v203 = vpop.f32.mrb[0].mxu0
    %204 = vdwg.mxu0
    %v205 = vpack.c.bf16 %v146, %v143
    %v206 = vpack.c.bf16 %v154, %v151
    %v207 = vpack.c.bf16 %v162, %v159
    %v208 = vpack.c.bf16 %v170, %v167
    %v209 = vpack.c.bf16 %v178, %v175
    %v210 = vpack.c.bf16 %v186, %v183
    %v211 = vpack.c.bf16 %v194, %v191
    %v212 = vpack.c.bf16 %v202, %v199
    %v213 = vld [vmem:[%s0] sm:$0xf]
    %214 = vmatprep.subr.bf16.mxu0 0
    %215 = vmatpush1.bf16.msra.mxu0 %v205
    %216 = vmatprep.subr.bf16.mxu0 0
    %217 = vmatpush1.bf16.msra.mxu0 %v206
    %218 = vmatprep.subr.bf16.mxu0 0
    %219 = vmatpush1.bf16.msra.mxu0 %v207
    %220 = vmatprep.subr.bf16.mxu0 0
    %221 = vmatpush1.bf16.msra.mxu0 %v208
    %222 = vmatprep.subr.bf16.mxu0 0
    %223 = vmatpush1.bf16.msra.mxu0 %v209
    %224 = vmatprep.subr.bf16.mxu0 0
    %225 = vmatpush1.bf16.msra.mxu0 %v210
    %226 = vmatprep.subr.bf16.mxu0 0
    %227 = vmatpush1.bf16.msra.mxu0 %v211
    %228 = vmatprep.subr.bf16.mxu0 0
    %229 = vmatpush1.bf16.msra.mxu0 %v212
    %230 = vmatprep.subr.bf16.mxu0 0
    %231 = vmatpush1.bf16.msra.mxu0 0
    %232 = vmatprep.subr.bf16.mxu0 0
    %233 = vmatpush1.bf16.msra.mxu0 0
    %234 = vmatprep.subr.bf16.mxu0 0
    %235 = vmatpush1.bf16.msra.mxu0 0
    %236 = vmatprep.subr.bf16.mxu0 0
    %237 = vmatpush1.bf16.msra.mxu0 0
    %238 = vmatprep.subr.bf16.mxu0 0
    %239 = vmatpush1.bf16.msra.mxu0 0
    %240 = vmatprep.subr.bf16.mxu0 0
    %241 = vmatpush1.bf16.msra.mxu0 0
    %242 = vmatprep.subr.bf16.mxu0 0
    %243 = vmatpush1.bf16.msra.mxu0 0
    %244 = vmatprep.subr.bf16.mxu0 0
    %245 = vmatpush1.bf16.msra.mxu0 0
    %246 = vmatprep.mubr.bf16.mxu0 0
    %247 = vmatmul.mubr.bf16.gmra.mrb[0].mxu0 %v213
    %v248 = vpop.f32.mrb[0].mxu0
    %v249 = vadd.f32 0.0, %v248
    %v250 = vpop.f32.mrb[0].mxu0
    %v251 = vpop.f32.mrb[0].mxu0
    %v252 = vpop.f32.mrb[0].mxu0
    %253 = vdwg.mxu0
    %p254 = scmp.eq.s32.totalorder 0, 0
    // Predicated region
    $region18: #{tpu_custom_call.1} parent=1 // pred_check
      %p255 = pneg %p254
    $region19: #{tpu_custom_call.1} parent=1 // pred_check_branch
      %257 = sbr.rel (%p255) target = $region21
    $region20: #{tpu_custom_call.1} parent=1 // pred_region
      %258 = vst [vmem:[#allocation2] sm:$0xff] %v249
    $region21: #{tpu_custom_call.1} parent=1 // pred_fallthru
      _
    %p259 = scmp.ne.s32.totalorder 0, 0
    // Predicated region
    $region22: #{tpu_custom_call.1} parent=1 // pred_check
      %p260 = pneg %p259
    $region23: #{tpu_custom_call.1} parent=1 // pred_check_branch
      %262 = sbr.rel (%p260) target = $region25
    $region24: #{tpu_custom_call.1} parent=1 // pred_region
      %v263 = vld [vmem:[#allocation2] sm:$0xff]
      %v264 = vadd.f32 %v263, %v249
      %265 = vst [vmem:[#allocation2] sm:$0xff] %v264
    $region25: #{tpu_custom_call.1} parent=1 // pred_fallthru
      _
    // Predicated region
    $region26: #{tpu_custom_call.1} parent=1 // pred_check
      %p266 = pneg %p254
    $region27: #{tpu_custom_call.1} parent=1 // pred_check_branch
      %268 = sbr.rel (%p266) target = $region29
    $region28: #{tpu_custom_call.1} parent=1 // pred_region
      %v269 = vld [vmem:[#allocation2] sm:$0xff]
      %v270 = vld [vmem:[%s3] sm:$0x1]
      %v272 = vlaneseq
      %v273 = vshrl.u32 %v272, 7
      %v274 = vsub.s32 0, %v273
      %v275 = vrot.slane %v270, %v274
      %v277 = vadd.f32 %v269, %v275
      %278 = vst [vmem:[#allocation2] sm:$0xff] %v277
    $region29: #{tpu_custom_call.1} parent=1 // pred_fallthru
      _
    // Predicated region
    $region30: #{tpu_custom_call.1} parent=1 // pred_check
      _
    $region31: #{tpu_custom_call.1} parent=1 // pred_check_branch
      %280 = sbr.rel (0) target = $region33
    $region32: #{tpu_custom_call.1} parent=1 // pred_region
      %s282 = ssub.s32 128, 128
      %283 = vsyncadd [#allocation3], %s282
      %s285 = sshll.u32 [#allocation2], 4
      %s286 = int_to_ptr.vmem [resolvable:$true] %s285
      %288 = dma.vmem_to_hbm [thread:$0]  %s286, 128, %s4, [#allocation3]
    $region33: #{tpu_custom_call.1} parent=1 // pred_fallthru
      _
    // Predicated region
    $region34: #{tpu_custom_call.1} parent=1 // pred_check
      _
    $region35: #{tpu_custom_call.1} parent=1 // pred_check_branch
      %290 = sbr.rel (0) target = $region37
    $region36: #{tpu_custom_call.1} parent=1 // pred_region
      %291 = dma.done [#allocation3], 128
    $region37: #{tpu_custom_call.1} parent=1 // pred_fallthru
      _
    %292 = vsyncpa [#allocation3], 1

</llo_original>
